<compile_context>
chip_gen: v7x
topology: tpu7x:2x2x1
jax: 0.10.0
libtpu: 0.0.40
codegen_flags: <defaults>
</compile_context>

<pallas_src>
import functools

import jax
import jax.numpy as jnp
from jax.experimental import pallas as pl
from jax.experimental.pallas import tpu as pltpu


def _round_up(x, m):
    return (x + m - 1) // m * m


def _ntxent_tile_kernel(rep_ref, out_ref, *, batch_size, half_rows, tile_rows):
    """One grid step: `tile_rows` query rows against the full resident rep.

    rep_ref : (2*half_rows, Dp) bf16 -- cosine-normalized, 1/sqrt(T)-scaled, resident.
    out_ref : (tile_rows, 1)    f32  -- per-row  logsumexp_{j!=i} S_ij - S_{i,partner(i)}.
    """
    b = batch_size
    bp = half_rows                     # padded rows per half
    tm = tile_rows
    n_cols = 2 * bp
    pad = bp - b

    s = pl.program_id(0)
    q_start = pl.multiple_of(s * tm, tm)

    q = rep_ref[pl.ds(q_start, tm), :]          # (tm, Dp) bf16, slice of the resident rep
    r = rep_ref[...]                            # (2bp, Dp) bf16

    # Q . R^T on the MXU (contraction on the last dim of both operands -> no RHS
    # transpose expected), f32 accumulation; already divided by temperature.
    sim = jax.lax.dot_general(
        q, r, (((1,), (1,)), ((), ())),
        preferred_element_type=jnp.float32,
    )                                           # (tm, 2bp) f32

    row_ids = jax.lax.broadcasted_iota(jnp.int32, (tm, n_cols), 0) + q_start
    col_ids = jax.lax.broadcasted_iota(jnp.int32, (tm, n_cols), 1)

    # ---- logsumexp over all j != i (mask self-similarity + zero-padded rep rows) ------
    invalid = col_ids == row_ids
    if pad > 0:  # static: B not tile-aligned -> also mask the zero-padded columns
        invalid = invalid | ((col_ids >= b) & (col_ids < bp))
        invalid = invalid | (col_ids >= bp + b)
    masked = jnp.where(invalid, jnp.float32(-1e30), sim)
    m = jnp.max(masked, axis=-1, keepdims=True)
    lse = m + jnp.log(jnp.sum(jnp.exp(masked - m), axis=-1, keepdims=True))   # (tm, 1)

    # ---- positive logit: column (i + bp) mod 2bp, extracted from the same sim tile ----
    partner = row_ids + bp
    partner = jnp.where(partner >= n_cols, partner - n_cols, partner)
    pos = jnp.sum(jnp.where(col_ids == partner, sim, jnp.float32(0.0)),
                  axis=-1, keepdims=True)                                     # (tm, 1)

    per_row = lse - pos
    if pad > 0:  # static: zero the padded query rows so the wrapper can sum everything
        gr = jax.lax.broadcasted_iota(jnp.int32, (tm, 1), 0) + q_start
        valid = (gr < b) | ((gr >= bp) & (gr < bp + b))
        per_row = jnp.where(valid, per_row, jnp.float32(0.0))

    out_ref[...] = per_row


def accoustic_net_loss(x1, x2, *, batch_size, temperature=1.0):
    """JAX/Pallas equivalent of accousticNet_loss.forward(x1, x2) (zis=x1, zjs=x2)."""
    assert x1.shape == x2.shape and x1.shape[0] == batch_size
    b = batch_size
    d = x1.shape[-1]
    dp = max(128, _round_up(d, 128))            # lane padding (zeros do not change dots)

    # ---- generation-aware tiling -------------------------------------------------------
    try:
        vmem_cap = int(pltpu.get_tpu_info().vmem_capacity_bytes)
    except Exception:
        vmem_cap = 64 * 1024 * 1024             # conservative fallback (v7x per-TC)

    if 2 * _round_up(b, 16) <= 256:
        # Small case: a single grid step covering all 2B rows (no tiling machinery).
        bp = _round_up(b, 16)
        tm = 2 * bp
    else:
        temp_budget = max(8 * 1024 * 1024, vmem_cap // 3)   # budget for (tm, 2B) f32 temps
        tm = 256
        while tm > 32 and 6 * tm * (2 * _round_up(b, tm)) * 4 > temp_budget:
            tm //= 2
        bp = _round_up(b, tm)
    n_rows = 2 * bp
    grid_steps = n_rows // tm

    # ---- wrapper-side prep: squeeze, f32 cosine-normalize (fold 1/sqrt(T)), bf16, pad --
    inv_sqrt_t = float(temperature) ** -0.5

    def _prep(z):
        z = z[:, 0, :].astype(jnp.float32)
        sq = jnp.sum(z * z, axis=-1, keepdims=True)
        # torch.nn.CosineSimilarity eps=1e-8 (clamps each norm; torch clamps the product
        # of norms -- identical except for near-zero rows).
        inv = jax.lax.rsqrt(jnp.maximum(sq, jnp.float32(1e-16))) * jnp.float32(inv_sqrt_t)
        zn = (z * inv).astype(jnp.bfloat16)
        return jnp.pad(zn, ((0, bp - b), (0, dp - d)))

    rep = jnp.concatenate([_prep(x2), _prep(x1)], axis=0)    # rep = [zjs ; zis], (2bp, dp)

    # VMEM budget: resident bf16 rep (budgeted at 2 buffers) + ~8 live (tm, 2bp) f32
    # temporaries + matmul staging, with slack.
    est = 2 * n_rows * dp * 2 + 8 * tm * n_rows * 4 + 4 * tm * dp + (1 << 20)
    vmem_limit = int(min(max(est, 32 * 1024 * 1024), int(vmem_cap * 0.9)))

    kernel = functools.partial(
        _ntxent_tile_kernel, batch_size=b, half_rows=bp, tile_rows=tm)

    per_row = pl.pallas_call(
        kernel,
        out_shape=jax.ShapeDtypeStruct((n_rows, 1), jnp.float32),
        grid=(grid_steps,),
        in_specs=[pl.BlockSpec((n_rows, dp), lambda s: (0, 0))],   # resident bf16 rep
        out_specs=pl.BlockSpec((tm, 1), lambda s: (s, 0)),
        compiler_params=pltpu.CompilerParams(
            dimension_semantics=("parallel",),   # row tiles are independent (v7x: 2 TCs)
            vmem_limit_bytes=vmem_limit,
        ),
    )(rep)

    return jnp.sum(per_row) * jnp.float32(1.0 / (2 * b))


def _reference_loss(x1, x2, batch_size, temperature=1.0):
    """Pure-JAX (f32) reference mirroring the PyTorch NTXentLoss forward."""
    rep = jnp.concatenate([x2[:, 0, :], x1[:, 0, :]], axis=0).astype(jnp.float32)
    n = 2 * batch_size
    norm = jnp.maximum(jnp.linalg.norm(rep, axis=-1, keepdims=True), 1e-8)
    r = rep / norm
    sim = (r @ r.T) / temperature
    masked = jnp.where(jnp.eye(n, dtype=bool), -jnp.inf, sim)
    lse = jax.nn.logsumexp(masked, axis=-1)
    idx = jnp.arange(n)
    pos = sim[idx, (idx + batch_size) % n]
    return jnp.sum(lse - pos) / n


if __name__ == "__main__":
    batch_size = 16   # module default
    feat = 32

    key = jax.random.PRNGKey(0)
    k1, k2 = jax.random.split(key)
    x1 = jax.random.normal(k1, (batch_size, 1, feat), dtype=jnp.float32)
    x2 = jax.random.normal(k2, (batch_size, 1, feat), dtype=jnp.float32)

    loss = accoustic_net_loss(x1, x2, batch_size=batch_size, temperature=1.0)
    loss = jax.block_until_ready(loss)

    ref = jax.block_until_ready(_reference_loss(x1, x2, batch_size, 1.0))
    # Tolerance loosened vs. the f32 reference because the gram matrix runs in bf16.
    assert jnp.allclose(loss, ref, rtol=2e-2, atol=2e-2), (loss, ref)

    print("KERNEL_OK")
</pallas_src>

<mosaic_0001>
module attributes {stable_mosaic.version = 11 : i64} {
  func.func @_ntxent_tile_kernel(%arg0: i32, %arg1: memref<32x128xbf16, #tpu.memory_space<vmem>>, %arg2: memref<32x1xf32, #tpu.memory_space<vmem>>) attributes {dimension_semantics = [#tpu.dimension_semantics<parallel>], iteration_bounds = array<i64: 1>, scalar_prefetch = 0 : i64, scratch_operands = 0 : i64, tpu.core_type = #tpu.core_type<tc>, window_params = [{pipeline_mode = #tpu.pipeline_mode<synchronous>, transform_indices = @transform_0, window_bounds = array<i64: 32, 128>}, {transform_indices = @transform_1, window_bounds = array<i64: 32, 1>}]} {
    %c32_i32 = arith.constant 32 : i32
    %0 = arith.muli %arg0, %c32_i32 : i32
    %1 = tpu.assume_multiple %0, 32 : i32
    %2 = arith.index_cast %1 : i32 to index
    %c0 = arith.constant 0 : index
    %3 = vector.load %arg1[%2, %c0] : memref<32x128xbf16, #tpu.memory_space<vmem>>, vector<32x128xbf16>
    %c0_0 = arith.constant 0 : index
    %c0_1 = arith.constant 0 : index
    %4 = vector.load %arg1[%c0_0, %c0_1] : memref<32x128xbf16, #tpu.memory_space<vmem>>, vector<32x128xbf16>
    %cst = arith.constant dense<0.000000e+00> : vector<32x32xf32>
    %5 = tpu.matmul %3, %4, %cst {dimension_numbers = #tpu.dot_dimension_numbers<[1], [1], [0], [0], [0, 0, 1, 0], [], []>} : vector<32x128xbf16>, vector<32x128xbf16>, vector<32x32xf32> -> vector<32x32xf32>
    %6 = tpu.iota {dimensions = array<i32: 0>} : vector<32x32xi32>
    %7 = vector.broadcast %1 : i32 to vector<32x32xi32>
    %8 = arith.addi %6, %7 : vector<32x32xi32>
    %9 = tpu.iota {dimensions = array<i32: 1>} : vector<32x32xi32>
    %10 = arith.cmpi eq, %9, %8 : vector<32x32xi32>
    %cst_2 = arith.constant -1.000000e+30 : f32
    %11 = vector.broadcast %cst_2 : f32 to vector<32x32xf32>
    %12 = arith.select %10, %11, %5 : vector<32x32xi1>, vector<32x32xf32>
    %cst_3 = arith.constant dense<0xFF800000> : vector<32xf32>
    %13 = vector.multi_reduction <maximumf>, %12, %cst_3 [1] : vector<32x32xf32> to vector<32xf32>
    %14 = vector.shape_cast %13 : vector<32xf32> to vector<32x1xf32>
    %15 = vector.broadcast %14 : vector<32x1xf32> to vector<32x32xf32>
    %16 = arith.subf %12, %15 : vector<32x32xf32>
    %17 = math.exp %16 : vector<32x32xf32>
    %cst_4 = arith.constant dense<0.000000e+00> : vector<32xf32>
    %18 = vector.multi_reduction <add>, %17, %cst_4 [1] : vector<32x32xf32> to vector<32xf32>
    %19 = vector.shape_cast %18 : vector<32xf32> to vector<32x1xf32>
    %20 = math.log %19 : vector<32x1xf32>
    %21 = arith.addf %14, %20 : vector<32x1xf32>
    %c16_i32 = arith.constant 16 : i32
    %22 = vector.broadcast %c16_i32 : i32 to vector<32x32xi32>
    %23 = arith.addi %8, %22 : vector<32x32xi32>
    %c32_i32_5 = arith.constant 32 : i32
    %24 = vector.broadcast %c32_i32_5 : i32 to vector<32x32xi32>
    %25 = arith.cmpi sge, %23, %24 : vector<32x32xi32>
    %c32_i32_6 = arith.constant 32 : i32
    %26 = vector.broadcast %c32_i32_6 : i32 to vector<32x32xi32>
    %27 = arith.subi %23, %26 : vector<32x32xi32>
    %28 = arith.select %25, %27, %23 : vector<32x32xi1>, vector<32x32xi32>
    %29 = arith.cmpi eq, %9, %28 : vector<32x32xi32>
    %cst_7 = arith.constant 0.000000e+00 : f32
    %30 = vector.broadcast %cst_7 : f32 to vector<32x32xf32>
    %31 = arith.select %29, %5, %30 : vector<32x32xi1>, vector<32x32xf32>
    %cst_8 = arith.constant dense<0.000000e+00> : vector<32xf32>
    %32 = vector.multi_reduction <add>, %31, %cst_8 [1] : vector<32x32xf32> to vector<32xf32>
    %33 = vector.shape_cast %32 : vector<32xf32> to vector<32x1xf32>
    %34 = arith.subf %21, %33 : vector<32x1xf32>
    %c0_9 = arith.constant 0 : index
    %c0_10 = arith.constant 0 : index
    %35 = vector.load %arg2[%c0_9, %c0_10] : memref<32x1xf32, #tpu.memory_space<vmem>>, vector<32x1xf32>
    tpu.vector_store %arg2[%c0_9, %c0_10], %34 {strides = array<i32>} : memref<32x1xf32, #tpu.memory_space<vmem>>, vector<32x1xf32>,
    return
  }
  func.func @transform_0(%arg0: i32) -> (i32, i32) {
    %c0_i32 = arith.constant 0 : i32
    %c0_i32_0 = arith.constant 0 : i32
    %c0_i32_1 = arith.constant 0 : i32
    return %c0_i32, %c0_i32_0 : i32, i32
  }
  func.func @transform_1(%arg0: i32) -> (i32, i32) {
    %c0_i32 = arith.constant 0 : i32
    %c0_i32_0 = arith.constant 0 : i32
    return %arg0, %c0_i32 : i32, i32
  }
}

</mosaic_0001>

<llo_original>
// kernel: tpu_custom_call.1
$region0: #{tpu_custom_call.1}
  #allocation0 [shape = 'u32[]', space=smem, size = 0x4, offset = 0x4, fixed_abs, tag = 'smem constant byte address 0x4 - core index']
  #allocation1 [shape = 'u32[144,128]{1,0:T(1,128)}', space=vmem, size = 0x12000, scoped, tag = 'internal scratch']
  %s0 = inlined_call_operand.hbm [shape: bf16[32,128], index: 0, kind: input, shape index: {}]
  %s1 = inlined_call_operand.vmem [shape: f32[32,1], index: 1, kind: output, shape index: {}]
  %s2 = sld [smem:[#allocation0]]
  $region18: #{tpu_custom_call.1} parent=0
    _
  %s4 = ssub.s32 1, %s2
  %s5 = scalar_select 0, %s4, %s2
  $region1: #{tpu_custom_call.1} parent=0
    #allocation2 [shape = 'u8[8192]{0}', space=vmem, size = 0x2000, scoped, tag = 'input window, operand 0, single buffered']
    #allocation3 [shape = 's32[1]{0}', space=sflag, size = 0x4, scoped, tag = 'scoped memory for tpu_custom_call.1']
    %6 = vsyncpa [#allocation3], 0
    // Predicated region
    $region2: #{tpu_custom_call.1} parent=1 // pred_check
      _
    $region3: #{tpu_custom_call.1} parent=1 // pred_check_branch
      %8 = sbr.rel (0) target = $region5
    $region4: #{tpu_custom_call.1} parent=1 // pred_region
      %s10 = ssub.s32 256, 256
      %11 = vsyncadd [#allocation3], %s10
      %s12 = sshll.u32 [#allocation2], 4
      %s13 = int_to_ptr.vmem [resolvable:$true] %s12
      %18 = dma.hbm_to_vmem [thread:$0]  %s0, 256, %s13, [#allocation3], 64, 64, 4
    $region5: #{tpu_custom_call.1} parent=1 // pred_fallthru
      _
    // Predicated region
    $region6: #{tpu_custom_call.1} parent=1 // pred_check
      _
    $region7: #{tpu_custom_call.1} parent=1 // pred_check_branch
      %20 = sbr.rel (0) target = $region9
    $region8: #{tpu_custom_call.1} parent=1 // pred_region
      %21 = dma.done [#allocation3], 256
    $region9: #{tpu_custom_call.1} parent=1 // pred_fallthru
      _
    %s23 = smul.u32 0, 32
    %s24 = sshra.s32 %s23, 3
    %s25 = sand.u32 %s23, 7
    %s26 = smul.addr %s24, 4
    %s27 = scalar_lea.vmem [#allocation2], %s26
    %v28 = vld [vmem:[%s27] sm:$0xf]
    %v29 = vld [vmem:[%s27 + $0x4] sm:$0xf]
    %v30 = vld [vmem:[%s27 + $0x8] sm:$0xf]
    %v31 = vld [vmem:[%s27 + $0xc] sm:$0xf]
    %v32 = vld [vmem:[#allocation2] sm:$0xf]
    %v33 = vld [vmem:[#allocation2 + $0x4] sm:$0xf]
    %v34 = vld [vmem:[#allocation2 + $0x8] sm:$0xf]
    %v35 = vld [vmem:[#allocation2 + $0xc] sm:$0xf]
    %v40 = vunpack.c.l.b16 %v28
    %v41 = vunpack.c.l.b16 %v29
    %v42 = vunpack.c.l.b16 %v30
    %v43 = vunpack.c.l.b16 %v31
    %v44 = vpack.c.b16 %v41, %v40
    %v45 = vpack.c.b16 %v43, %v42
    %v52 = vunpack.c.l.b16 %v32
    %v53 = vunpack.c.l.b16 %v33
    %v54 = vunpack.c.l.b16 %v34
    %v55 = vunpack.c.l.b16 %v35
    %v56 = vpack.c.b16 %v53, %v52
    %v57 = vpack.c.b16 %v55, %v54
    %60 = vmatprep.subr.bf16.mxu0 0
    %61 = vmatpush1.bf16.xpose.msra.mxu0 %v56
    %62 = vmatprep.subr.bf16.mxu0 0
    %63 = vmatpush1.bf16.xpose.msra.mxu0 %v57
    %64 = vmatprep.subr.bf16.mxu0 0
    %65 = vmatpush1.bf16.xpose.msra.mxu0 0
    %66 = vmatprep.subr.bf16.mxu0 0
    %67 = vmatpush1.bf16.xpose.msra.mxu0 0
    %68 = vmatprep.subr.bf16.mxu0 0
    %69 = vmatpush1.bf16.xpose.msra.mxu0 0
    %70 = vmatprep.subr.bf16.mxu0 0
    %71 = vmatpush1.bf16.xpose.msra.mxu0 0
    %72 = vmatprep.subr.bf16.mxu0 0
    %73 = vmatpush1.bf16.xpose.msra.mxu0 0
    %74 = vmatprep.subr.bf16.mxu0 0
    %75 = vmatpush1.bf16.xpose.msra.mxu0 0
    %76 = vmatprep.subr.bf16.mxu0 0
    %77 = vmatpush1.bf16.xpose.msra.mxu0 0
    %78 = vmatprep.subr.bf16.mxu0 0
    %79 = vmatpush1.bf16.xpose.msra.mxu0 0
    %80 = vmatprep.subr.bf16.mxu0 0
    %81 = vmatpush1.bf16.xpose.msra.mxu0 0
    %82 = vmatprep.subr.bf16.mxu0 0
    %83 = vmatpush1.bf16.xpose.msra.mxu0 0
    %84 = vmatprep.subr.bf16.mxu0 0
    %85 = vmatpush1.bf16.xpose.msra.mxu0 0
    %86 = vmatprep.subr.bf16.mxu0 0
    %87 = vmatpush1.bf16.xpose.msra.mxu0 0
    %88 = vmatprep.subr.bf16.mxu0 0
    %89 = vmatpush1.bf16.xpose.msra.mxu0 0
    %90 = vmatprep.subr.bf16.mxu0 0
    %91 = vmatpush1.bf16.xpose.msra.mxu0 0
    %92 = vmatprep.mubr.bf16.mxu0 0
    %93 = vmatmul.mubr.bf16.gmra.mrb[0].mxu0 %v44
    %v94 = vpop.f32.mrb[0].mxu0
    %v95 = vadd.f32 0.0, %v94
    %v96 = vpop.f32.mrb[0].mxu0
    %v97 = vpop.f32.mrb[0].mxu0
    %v98 = vadd.f32 0.0, %v97
    %v99 = vpop.f32.mrb[0].mxu0
    %100 = vmatprep.mubr.bf16.mxu0 0
    %101 = vmatmul.mubr.bf16.gmra.mrb[0].mxu0 %v45
    %v102 = vpop.f32.mrb[0].mxu0
    %v103 = vadd.f32 0.0, %v102
    %v104 = vpop.f32.mrb[0].mxu0
    %v105 = vpop.f32.mrb[0].mxu0
    %v106 = vadd.f32 0.0, %v105
    %v107 = vpop.f32.mrb[0].mxu0
    %108 = vdwg.mxu0
    %v109 = vlaneseq
    %v110 = vshrl.u32 %v109, 7
    %v111 = vadd.s32 %v110, 8
    %v112 = vadd.s32 %v110, 16
    %v113 = vadd.s32 %v110, 24
    %v114 = vstv %s23
    %v115 = vadd.s32 %v110, %v114
    %v116 = vadd.s32 %v111, %v114
    %v117 = vadd.s32 %v112, %v114
    %v118 = vadd.s32 %v113, %v114
    %v119 = vlaneseq
    %v120 = vand.u32 %v119, 127
    %vm121 = vcmp.eq.s32.totalorder %v120, %v115
    %vm122 = vcmp.eq.s32.totalorder %v120, %v116
    %vm123 = vcmp.eq.s32.totalorder %v120, %v117
    %vm124 = vcmp.eq.s32.totalorder %v120, %v118
    %v125 = vsel %vm121, -1e+30, %v95
    %v126 = vsel %vm122, -1e+30, %v98
    %v127 = vsel %vm123, -1e+30, %v103
    %v128 = vsel %vm124, -1e+30, %v106
    %vm129 = vcmask 261120
    %v130 = vsel %vm129, %v125, -inf
    %131 = vmax.xlane.f32.xlu0 %v130
    %v132 = vpop.xlane.xlu0 %131
    %v133 = vsel %vm129, %v126, -inf
    %134 = vmax.xlane.f32.xlu0 %v133
    %v135 = vpop.xlane.xlu0 %134
    %v136 = vsel %vm129, %v127, -inf
    %137 = vmax.xlane.f32.xlu0 %v136
    %v138 = vpop.xlane.xlu0 %137
    %v139 = vsel %vm129, %v128, -inf
    %140 = vmax.xlane.f32.xlu0 %v139
    %v141 = vpop.xlane.xlu0 %140
    %v142 = vsub.f32 %v125, %v132
    %v143 = vsub.f32 %v126, %v135
    %v144 = vsub.f32 %v127, %v138
    %v145 = vsub.f32 %v128, %v141
    %v146 = vmul.f32 %v142, 1.442695
    %v147 = vpow.pop %v146
    %v148 = vmul.f32 %v143, 1.442695
    %v149 = vpow.pop %v148
    %v150 = vmul.f32 %v144, 1.442695
    %v151 = vpow.pop %v150
    %v152 = vmul.f32 %v145, 1.442695
    %v153 = vpow.pop %v152
    %v154 = vsel %vm129, %v147, 0.0
    %155 = vadd.xlane.f32.xlu0 %v154
    %v156 = vpop.xlane.xlu0 %155
    %v157 = vsel %vm129, %v149, 0.0
    %158 = vadd.xlane.f32.xlu0 %v157
    %v159 = vpop.xlane.xlu0 %158
    %v160 = vsel %vm129, %v151, 0.0
    %161 = vadd.xlane.f32.xlu0 %v160
    %v162 = vpop.xlane.xlu0 %161
    %v163 = vsel %vm129, %v153, 0.0
    %164 = vadd.xlane.f32.xlu0 %v163
    %v165 = vpop.xlane.xlu0 %164
    %v166 = vlog2.pop %v156
    %v167 = vmul.f32 %v166, 0.6931472
    %v168 = vlog2.pop %v159
    %v169 = vmul.f32 %v168, 0.6931472
    %v170 = vlog2.pop %v162
    %v171 = vmul.f32 %v170, 0.6931472
    %v172 = vlog2.pop %v165
    %v173 = vmul.f32 %v172, 0.6931472
    %v174 = vadd.f32 %v132, %v167
    %v175 = vadd.f32 %v135, %v169
    %v176 = vadd.f32 %v138, %v171
    %v177 = vadd.f32 %v141, %v173
    %v178 = vadd.s32 %v115, 16
    %v179 = vadd.s32 %v116, 16
    %v180 = vadd.s32 %v117, 16
    %v181 = vadd.s32 %v118, 16
    %vm182 = vcmp.ge.s32.totalorder %v178, 32
    %vm183 = vcmp.ge.s32.totalorder %v179, 32
    %vm184 = vcmp.ge.s32.totalorder %v180, 32
    %vm185 = vcmp.ge.s32.totalorder %v181, 32
    %v186 = vsub.s32 %v178, 32
    %v187 = vsub.s32 %v179, 32
    %v188 = vsub.s32 %v180, 32
    %v189 = vsub.s32 %v181, 32
    %v190 = vsel %vm182, %v186, %v178
    %v191 = vsel %vm183, %v187, %v179
    %v192 = vsel %vm184, %v188, %v180
    %v193 = vsel %vm185, %v189, %v181
    %vm194 = vcmp.eq.s32.totalorder %v120, %v190
    %vm195 = vcmp.eq.s32.totalorder %v120, %v191
    %vm196 = vcmp.eq.s32.totalorder %v120, %v192
    %vm197 = vcmp.eq.s32.totalorder %v120, %v193
    %v198 = vsel %vm194, %v95, 0.0
    %v199 = vsel %vm195, %v98, 0.0
    %v200 = vsel %vm196, %v103, 0.0
    %v201 = vsel %vm197, %v106, 0.0
    %v202 = vsel %vm129, %v198, 0.0
    %203 = vadd.xlane.f32.xlu0 %v202
    %v204 = vpop.xlane.xlu0 %203
    %v205 = vsel %vm129, %v199, 0.0
    %206 = vadd.xlane.f32.xlu0 %v205
    %v207 = vpop.xlane.xlu0 %206
    %v208 = vsel %vm129, %v200, 0.0
    %209 = vadd.xlane.f32.xlu0 %v208
    %v210 = vpop.xlane.xlu0 %209
    %v211 = vsel %vm129, %v201, 0.0
    %212 = vadd.xlane.f32.xlu0 %v211
    %v213 = vpop.xlane.xlu0 %212
    %v214 = vsub.f32 %v174, %v204
    %v215 = vsub.f32 %v175, %v207
    %v216 = vsub.f32 %v176, %v210
    %v217 = vsub.f32 %v177, %v213
    %vm218 = vcmask 7168
    %219 = vst.msk [vmem:[%s1] sm:$0xff] %vm218, %v214
    %220 = vst.msk [vmem:[%s1 + $0x8] sm:$0xff] %vm218, %v215
    %221 = vst.msk [vmem:[%s1 + $0x10] sm:$0xff] %vm218, %v216
    %222 = vst.msk [vmem:[%s1 + $0x18] sm:$0xff] %vm218, %v217
    // Predicated region
    $region10: #{tpu_custom_call.1} parent=1 // pred_check
      _
    $region11: #{tpu_custom_call.1} parent=1 // pred_check_branch
      %224 = sbr.rel (0) target = $region13
    $region12: #{tpu_custom_call.1} parent=1 // pred_region
      _
    $region13: #{tpu_custom_call.1} parent=1 // pred_fallthru
      _
    // Predicated region
    $region14: #{tpu_custom_call.1} parent=1 // pred_check
      _
    $region15: #{tpu_custom_call.1} parent=1 // pred_check_branch
      %226 = sbr.rel (0) target = $region17
    $region16: #{tpu_custom_call.1} parent=1 // pred_region
      _
    $region17: #{tpu_custom_call.1} parent=1 // pred_fallthru
      _
    %227 = vsyncpa [#allocation3], 1

</llo_original>
